<compile_context>
chip_gen: v7x
topology: tpu7x:2x2x1
jax: 0.10.0
libtpu: 0.0.40
codegen_flags: <defaults>
</compile_context>

<pallas_src>
import jax
import jax.numpy as jnp
from jax.experimental import pallas as pl
from jax.experimental.pallas import tpu as pltpu

# ---- static module configuration ----
NUM_VECTOR_FIELDS = 5
ENABLE_6DOF = False
ROT_DIM = 3 if ENABLE_6DOF else 1
SIN_CH = 3                        # centerdir_vectors[:, 3:3+ROT_DIM]
COS_CH = 3 + ROT_DIM              # centerdir_vectors[:, 3+ROT_DIM : 3+2*ROT_DIM]

LANE = 128                        # TPU lane width (last-dim tile)
ROW_TILE = 4096                   # rows of 128 lanes per grid step (~2 MiB/stream f32);
                                  # could be raised further on 128 MiB-VMEM v5e/v6e.
CORE_SPLIT = 2                    # leading "parallel" axis -> both v7x TensorCores

# self.tmp = nn.Conv2d(8, 8, 3) is declared in __init__ but never used in forward();
# weights allocated deterministically only for parameter-shape fidelity.
TMP_CONV_W = jnp.zeros((8, 8, 3, 3), jnp.float32)
TMP_CONV_B = jnp.zeros((8,), jnp.float32)


def _cdiv(a, b):
    return -(-a // b)


def _round_up(a, b):
    return _cdiv(a, b) * b


def _orientation_loss_kernel(pred_sin_ref, pred_cos_ref, gt_sin_ref, gt_cos_ref,
                             w_ref, acc_sin_ref, acc_cos_ref):
    # pred_*_ref / gt_*_ref: (1, ROT_DIM, th, 128) VMEM f32
    # w_ref:                 (1, th, 128)          VMEM f32 (fg-masked weights)
    # acc_*_ref:             (1, 1, ROT_DIM*8, 128) VMEM f32 output block,
    #                        resident across the row-tile (reduction) axis.
    t = pl.program_id(2)

    @pl.when(t == 0)
    def _init():
        acc_sin_ref[...] = jnp.zeros_like(acc_sin_ref)
        acc_cos_ref[...] = jnp.zeros_like(acc_cos_ref)

    th = w_ref.shape[1]
    w = w_ref[0]                                     # (th, 128) f32
    for r in range(ROT_DIM):                         # static unrolled (ROT_DIM small)
        d_sin = jnp.abs(pred_sin_ref[0, r] - gt_sin_ref[0, r]) * w
        d_cos = jnp.abs(pred_cos_ref[0, r] - gt_cos_ref[0, r]) * w
        # Fold the (th,128) tile into an (8,128) partial sum: pure VALU vreg adds,
        # no cross-lane XLU work and no SMEM scalar RMW in the hot loop.
        psum_sin = d_sin.reshape(th // 8, 8, LANE).sum(axis=0)
        psum_cos = d_cos.reshape(th // 8, 8, LANE).sum(axis=0)
        acc_sin_ref[0, 0, r * 8:(r + 1) * 8, :] += psum_sin
        acc_cos_ref[0, 0, r * 8:(r + 1) * 8, :] += psum_cos


def orientation_loss_pallas(prediction, gt_sin, gt_cos, weights):
    """prediction: (B, C, H, W) f32; gt_*: (B, ROT_DIM, H, W) f32;
    weights: (B, H, W) f32 (fg-masked). Returns ((B, ROT_DIM), (B, ROT_DIM)) f32."""
    B, C, H, W = prediction.shape
    S = H * W
    rows = _cdiv(S, LANE)
    n_tiles_raw = max(1, _cdiv(rows, ROW_TILE))
    core_split = CORE_SPLIT if n_tiles_raw >= CORE_SPLIT else 1
    n_tiles = _round_up(n_tiles_raw, core_split)
    th = _round_up(_cdiv(rows, n_tiles), 8)          # balanced, sublane-aligned tile
    padded_rows = n_tiles * th
    pad = padded_rows * LANE - S
    tiles_per_core = n_tiles // core_split

    def flat_pad(x, n_lead):
        x = x.reshape(x.shape[:n_lead] + (S,))
        if pad:
            x = jnp.pad(x, [(0, 0)] * n_lead + [(0, pad)])   # weights are 0 there
        return x.reshape(x.shape[:n_lead] + (padded_rows, LANE))

    if pad == 0 and SIN_CH % ROT_DIM == 0 and COS_CH % ROT_DIM == 0:
        # No wrapper copies: the reshape is layout-free, and the sin/cos channels
        # are picked directly by the BlockSpec channel block index.
        pred_flat = prediction.reshape(B, C, padded_rows, LANE)
        sin_blk, cos_blk = SIN_CH // ROT_DIM, COS_CH // ROT_DIM
    else:
        # Ragged tail: slice only the 2*ROT_DIM channels the kernel reads, then pad.
        pred_flat = flat_pad(prediction[:, SIN_CH:SIN_CH + 2 * ROT_DIM], 2)
        sin_blk, cos_blk = 0, 1
    sin_flat = flat_pad(gt_sin, 2)
    cos_flat = flat_pad(gt_cos, 2)
    w_flat = flat_pad(weights, 1)

    def row_blk(c, t):
        return c * tiles_per_core + t

    grid_spec = pltpu.PrefetchScalarGridSpec(
        num_scalar_prefetch=0,
        grid=(core_split, B, tiles_per_core),          # reduction (row-tile) axis last
        in_specs=[
            pl.BlockSpec((1, ROT_DIM, th, LANE),
                         lambda c, b, t: (b, sin_blk, row_blk(c, t), 0)),
            pl.BlockSpec((1, ROT_DIM, th, LANE),
                         lambda c, b, t: (b, cos_blk, row_blk(c, t), 0)),
            pl.BlockSpec((1, ROT_DIM, th, LANE),
                         lambda c, b, t: (b, 0, row_blk(c, t), 0)),
            pl.BlockSpec((1, ROT_DIM, th, LANE),
                         lambda c, b, t: (b, 0, row_blk(c, t), 0)),
            pl.BlockSpec((1, th, LANE),
                         lambda c, b, t: (b, row_blk(c, t), 0)),
        ],
        out_specs=(
            pl.BlockSpec((1, 1, ROT_DIM * 8, LANE), lambda c, b, t: (c, b, 0, 0)),
            pl.BlockSpec((1, 1, ROT_DIM * 8, LANE), lambda c, b, t: (c, b, 0, 0)),
        ),
    )

    acc_sin, acc_cos = pl.pallas_call(
        _orientation_loss_kernel,
        out_shape=(
            jax.ShapeDtypeStruct((core_split, B, ROT_DIM * 8, LANE), jnp.float32),
            jax.ShapeDtypeStruct((core_split, B, ROT_DIM * 8, LANE), jnp.float32),
        ),
        grid_spec=grid_spec,
        compiler_params=pltpu.CompilerParams(
            dimension_semantics=("parallel", "parallel", "arbitrary"),
            vmem_limit_bytes=32 * 1024 * 1024,          # safe on v5e/v6e/v7x
        ),
    )(pred_flat, pred_flat, sin_flat, cos_flat, w_flat)

    # Tiny cross-core / cross-lane final reduce, handled by XLA outside the kernel.
    loss_sin = acc_sin.reshape(core_split, B, ROT_DIM, 8, LANE).sum(axis=(0, 3, 4))
    loss_cos = acc_cos.reshape(core_split, B, ROT_DIM, 8, LANE).sum(axis=(0, 3, 4))
    return loss_sin, loss_cos


def instance_group_weighting(instances, labels, ignore_mask, w_fg, w_bg,
                             max_instances=32):
    # TODO(synk): approximates InstanceGroupWeighting(border_weight=1.0,
    # border_weight_px=0, add_distance_gauss_weight=False): per-instance
    # count-normalized fg weights, count-normalized bg weights, ignore pixels -> 0.
    # Uses scatter-add bincount + gather (no (B,H,W,K) one-hot materialization).
    B = instances.shape[0]
    bg = labels == 0
    fg = jnp.logical_not(bg)
    inst = jnp.clip(instances, 0, max_instances).astype(jnp.int32)        # (B,H,W)
    flat = inst.reshape(B, -1)
    counts = jax.vmap(
        lambda x: jnp.zeros((max_instances + 1,), jnp.float32).at[x].add(1.0))(flat)
    inv_counts = jnp.where(counts > 0, 1.0 / jnp.maximum(counts, 1.0), 0.0)
    per_pix_inv = jnp.take_along_axis(inv_counts, flat, axis=1).reshape(inst.shape)
    bg_count = jnp.maximum(bg.sum(axis=(1, 2), keepdims=True).astype(jnp.float32), 1.0)
    w = jnp.where(fg, w_fg * per_pix_inv, w_bg / bg_count)
    if ignore_mask is not None:
        w = jnp.where(ignore_mask == 1, 0.0, w)
    # Fold the fg mask into the weights: with no_instance_loss=False the reference
    # only sums foreground pixels, so background contributions are exactly zero.
    w = jnp.where(fg, w, 0.0)
    return w.astype(jnp.float32)


def orientation_loss_forward(prediction, sample, centerdir_gt, ignore_mask=None,
                             w_orientation=1.0, w_fg_orientation=1.0,
                             w_bg_orientation=1.0):
    B = prediction.shape[0]
    instances = sample['instance'][:, 0]                 # squeeze(1) -> (B, H, W)
    labels = sample['label']                              # (B, H, W)
    ign = ignore_mask[:, 0] if ignore_mask is not None else None
    mask_weights = instance_group_weighting(instances, labels, ign,
                                            w_fg_orientation, w_bg_orientation)

    gt_sin = centerdir_gt['gt_orientation_sin'][:, :ROT_DIM].astype(jnp.float32)
    gt_cos = centerdir_gt['gt_orientation_cos'][:, :ROT_DIM].astype(jnp.float32)

    loss_sin, loss_cos = orientation_loss_pallas(prediction.astype(jnp.float32),
                                                 gt_sin, gt_cos, mask_weights)

    loss_sin_list = [w_orientation * loss_sin[:, r] for r in range(ROT_DIM)]
    loss_cos_list = [w_orientation * loss_cos[:, r] for r in range(ROT_DIM)]
    loss_orientation = sum(loss_sin_list) + sum(loss_cos_list)        # (B,)
    # (+ prediction.sum() * 0 from the reference is a no-op for forward values)

    # TODO(synk): CenterDirectionLoss is an external module not defined here;
    # its 8 sub-losses are returned as zeros with the correct per-batch shape.
    zeros = jnp.zeros((B,), jnp.float32)
    all_centerdir_losses = tuple(zeros for _ in range(8))

    losses_main = [all_centerdir_losses[0] + loss_orientation]
    return tuple(losses_main + list(all_centerdir_losses[1:]) + [loss_orientation]
                 + loss_sin_list + loss_cos_list)


if __name__ == "__main__":
    key = jax.random.PRNGKey(0)

    def run_case(H, W):
        B, C = 2, 8
        k1, k2, k3, k4 = jax.random.split(jax.random.fold_in(key, H), 4)
        prediction = jax.random.normal(k1, (B, C, H, W), jnp.float32)
        instances = jax.random.randint(k2, (B, 1, H, W), 0, 4).astype(jnp.int32)
        labels = (instances[:, 0] > 0).astype(jnp.int32)
        sample = {'instance': instances, 'label': labels}
        centerdir_gt = {
            'gt_orientation_sin': jax.random.normal(k3, (B, ROT_DIM, H, W), jnp.float32),
            'gt_orientation_cos': jax.random.normal(k4, (B, ROT_DIM, H, W), jnp.float32),
        }

        # Pure-JAX reference for the Pallas-computed weighted L1 reduction.
        mw = instance_group_weighting(instances[:, 0], labels, None, 1.0, 1.0)
        gt_s = centerdir_gt['gt_orientation_sin']
        gt_c = centerdir_gt['gt_orientation_cos']
        ref_sin = jnp.sum(mw[:, None] * jnp.abs(
            prediction[:, SIN_CH:SIN_CH + ROT_DIM] - gt_s), axis=(2, 3))
        ref_cos = jnp.sum(mw[:, None] * jnp.abs(
            prediction[:, COS_CH:COS_CH + ROT_DIM] - gt_c), axis=(2, 3))
        got_sin, got_cos = orientation_loss_pallas(prediction, gt_s, gt_c, mw)
        assert jnp.allclose(got_sin, ref_sin, rtol=1e-4, atol=1e-4)
        assert jnp.allclose(got_cos, ref_cos, rtol=1e-4, atol=1e-4)

        out = orientation_loss_forward(prediction, sample, centerdir_gt)
        jax.block_until_ready(out)

    run_case(16, 16)   # ragged path (pad > 0): only the 2 needed channels are copied
    run_case(32, 32)   # copy-free path (pad == 0): channels picked by BlockSpec
    print("KERNEL_OK")
</pallas_src>

<mosaic_0001>
module attributes {stable_mosaic.version = 11 : i64} {
  func.func @_orientation_loss_kernel(%arg0: i32, %arg1: i32, %arg2: i32, %arg3: memref<1x1x8x128xf32, #tpu.memory_space<vmem>>, %arg4: memref<1x1x8x128xf32, #tpu.memory_space<vmem>>, %arg5: memref<1x1x8x128xf32, #tpu.memory_space<vmem>>, %arg6: memref<1x1x8x128xf32, #tpu.memory_space<vmem>>, %arg7: memref<1x8x128xf32, #tpu.memory_space<vmem>>, %arg8: memref<1x1x8x128xf32, #tpu.memory_space<vmem>>, %arg9: memref<1x1x8x128xf32, #tpu.memory_space<vmem>>) attributes {dimension_semantics = [#tpu.dimension_semantics<parallel>, #tpu.dimension_semantics<parallel>, #tpu.dimension_semantics<arbitrary>], iteration_bounds = array<i64: 1, 2, 1>, scalar_prefetch = 0 : i64, scratch_operands = 0 : i64, tpu.core_type = #tpu.core_type<tc>, window_params = [{transform_indices = @transform_0, window_bounds = array<i64: 1, 1, 8, 128>}, {transform_indices = @transform_1, window_bounds = array<i64: 1, 1, 8, 128>}, {transform_indices = @transform_2, window_bounds = array<i64: 1, 1, 8, 128>}, {transform_indices = @transform_3, window_bounds = array<i64: 1, 1, 8, 128>}, {transform_indices = @transform_4, window_bounds = array<i64: 1, 8, 128>}, {transform_indices = @transform_5, window_bounds = array<i64: 1, 1, 8, 128>}, {transform_indices = @transform_6, window_bounds = array<i64: 1, 1, 8, 128>}]} {
    %c0_i32 = arith.constant 0 : i32
    %0 = arith.cmpi eq, %arg2, %c0_i32 : i32
    %1 = arith.extui %0 : i1 to i32
    %c0_i32_0 = arith.constant 0 : i32
    %2 = arith.cmpi ne, %1, %c0_i32_0 : i32
    scf.if %2 {
      %cst_36 = arith.constant 0.000000e+00 : f32
      %35 = vector.broadcast %cst_36 : f32 to vector<1x1x8x128xf32>
      %c0_37 = arith.constant 0 : index
      %c0_38 = arith.constant 0 : index
      %c0_39 = arith.constant 0 : index
      %c0_40 = arith.constant 0 : index
      %36 = vector.load %arg8[%c0_37, %c0_38, %c0_39, %c0_40] : memref<1x1x8x128xf32, #tpu.memory_space<vmem>>, vector<1x1x8x128xf32>
      tpu.vector_store %arg8[%c0_37, %c0_38, %c0_39, %c0_40], %35 {strides = array<i32>} : memref<1x1x8x128xf32, #tpu.memory_space<vmem>>, vector<1x1x8x128xf32>,
      %cst_41 = arith.constant 0.000000e+00 : f32
      %37 = vector.broadcast %cst_41 : f32 to vector<1x1x8x128xf32>
      %c0_42 = arith.constant 0 : index
      %c0_43 = arith.constant 0 : index
      %c0_44 = arith.constant 0 : index
      %c0_45 = arith.constant 0 : index
      %38 = vector.load %arg9[%c0_42, %c0_43, %c0_44, %c0_45] : memref<1x1x8x128xf32, #tpu.memory_space<vmem>>, vector<1x1x8x128xf32>
      tpu.vector_store %arg9[%c0_42, %c0_43, %c0_44, %c0_45], %37 {strides = array<i32>} : memref<1x1x8x128xf32, #tpu.memory_space<vmem>>, vector<1x1x8x128xf32>,
    } else {
    }
    %c0 = arith.constant 0 : index
    %c0_1 = arith.constant 0 : index
    %c0_2 = arith.constant 0 : index
    %3 = vector.load %arg7[%c0, %c0_1, %c0_2] : memref<1x8x128xf32, #tpu.memory_space<vmem>>, vector<1x8x128xf32>
    %4 = vector.shape_cast %3 : vector<1x8x128xf32> to vector<8x128xf32>
    %c0_3 = arith.constant 0 : index
    %c0_4 = arith.constant 0 : index
    %c0_5 = arith.constant 0 : index
    %c0_6 = arith.constant 0 : index
    %5 = vector.load %arg3[%c0_3, %c0_4, %c0_5, %c0_6] : memref<1x1x8x128xf32, #tpu.memory_space<vmem>>, vector<1x1x8x128xf32>
    %6 = vector.shape_cast %5 : vector<1x1x8x128xf32> to vector<8x128xf32>
    %c0_7 = arith.constant 0 : index
    %c0_8 = arith.constant 0 : index
    %c0_9 = arith.constant 0 : index
    %c0_10 = arith.constant 0 : index
    %7 = vector.load %arg5[%c0_7, %c0_8, %c0_9, %c0_10] : memref<1x1x8x128xf32, #tpu.memory_space<vmem>>, vector<1x1x8x128xf32>
    %8 = vector.shape_cast %7 : vector<1x1x8x128xf32> to vector<8x128xf32>
    %9 = arith.subf %6, %8 : vector<8x128xf32>
    %10 = math.absf %9 : vector<8x128xf32>
    %11 = arith.mulf %10, %4 : vector<8x128xf32>
    %c0_11 = arith.constant 0 : index
    %c0_12 = arith.constant 0 : index
    %c0_13 = arith.constant 0 : index
    %c0_14 = arith.constant 0 : index
    %12 = vector.load %arg4[%c0_11, %c0_12, %c0_13, %c0_14] : memref<1x1x8x128xf32, #tpu.memory_space<vmem>>, vector<1x1x8x128xf32>
    %13 = vector.shape_cast %12 : vector<1x1x8x128xf32> to vector<8x128xf32>
    %c0_15 = arith.constant 0 : index
    %c0_16 = arith.constant 0 : index
    %c0_17 = arith.constant 0 : index
    %c0_18 = arith.constant 0 : index
    %14 = vector.load %arg6[%c0_15, %c0_16, %c0_17, %c0_18] : memref<1x1x8x128xf32, #tpu.memory_space<vmem>>, vector<1x1x8x128xf32>
    %15 = vector.shape_cast %14 : vector<1x1x8x128xf32> to vector<8x128xf32>
    %16 = arith.subf %13, %15 : vector<8x128xf32>
    %17 = math.absf %16 : vector<8x128xf32>
    %18 = arith.mulf %17, %4 : vector<8x128xf32>
    %19 = vector.shape_cast %11 : vector<8x128xf32> to vector<1x8x128xf32>
    %cst = arith.constant dense<0.000000e+00> : vector<8x128xf32>
    %20 = vector.multi_reduction <add>, %19, %cst [0] : vector<1x8x128xf32> to vector<8x128xf32>
    %21 = vector.shape_cast %18 : vector<8x128xf32> to vector<1x8x128xf32>
    %cst_19 = arith.constant dense<0.000000e+00> : vector<8x128xf32>
    %22 = vector.multi_reduction <add>, %21, %cst_19 [0] : vector<1x8x128xf32> to vector<8x128xf32>
    %c0_20 = arith.constant 0 : index
    %c0_21 = arith.constant 0 : index
    %c0_22 = arith.constant 0 : index
    %c0_23 = arith.constant 0 : index
    %23 = vector.load %arg8[%c0_20, %c0_21, %c0_22, %c0_23] : memref<1x1x8x128xf32, #tpu.memory_space<vmem>>, vector<1x1x8x128xf32>
    %24 = vector.shape_cast %23 : vector<1x1x8x128xf32> to vector<8x128xf32>
    %25 = arith.addf %24, %20 : vector<8x128xf32>
    %c0_24 = arith.constant 0 : index
    %c0_25 = arith.constant 0 : index
    %c0_26 = arith.constant 0 : index
    %c0_27 = arith.constant 0 : index
    %26 = vector.load %arg8[%c0_24, %c0_25, %c0_26, %c0_27] : memref<1x1x8x128xf32, #tpu.memory_space<vmem>>, vector<1x1x8x128xf32>
    %27 = vector.shape_cast %26 : vector<1x1x8x128xf32> to vector<8x128xf32>
    %28 = vector.shape_cast %25 : vector<8x128xf32> to vector<1x1x8x128xf32>
    tpu.vector_store %arg8[%c0_24, %c0_25, %c0_26, %c0_27], %28 {strides = array<i32>} : memref<1x1x8x128xf32, #tpu.memory_space<vmem>>, vector<1x1x8x128xf32>,
    %c0_28 = arith.constant 0 : index
    %c0_29 = arith.constant 0 : index
    %c0_30 = arith.constant 0 : index
    %c0_31 = arith.constant 0 : index
    %29 = vector.load %arg9[%c0_28, %c0_29, %c0_30, %c0_31] : memref<1x1x8x128xf32, #tpu.memory_space<vmem>>, vector<1x1x8x128xf32>
    %30 = vector.shape_cast %29 : vector<1x1x8x128xf32> to vector<8x128xf32>
    %31 = arith.addf %30, %22 : vector<8x128xf32>
    %c0_32 = arith.constant 0 : index
    %c0_33 = arith.constant 0 : index
    %c0_34 = arith.constant 0 : index
    %c0_35 = arith.constant 0 : index
    %32 = vector.load %arg9[%c0_32, %c0_33, %c0_34, %c0_35] : memref<1x1x8x128xf32, #tpu.memory_space<vmem>>, vector<1x1x8x128xf32>
    %33 = vector.shape_cast %32 : vector<1x1x8x128xf32> to vector<8x128xf32>
    %34 = vector.shape_cast %31 : vector<8x128xf32> to vector<1x1x8x128xf32>
    tpu.vector_store %arg9[%c0_32, %c0_33, %c0_34, %c0_35], %34 {strides = array<i32>} : memref<1x1x8x128xf32, #tpu.memory_space<vmem>>, vector<1x1x8x128xf32>,
    return
  }
  func.func @transform_0(%arg0: i32, %arg1: i32, %arg2: i32) -> (i32, i32, i32, i32) {
    %c1_i32 = arith.constant 1 : i32
    %0 = arith.muli %arg0, %c1_i32 : i32
    %1 = arith.addi %0, %arg2 : i32
    %c0_i32 = arith.constant 0 : i32
    %c0_i32_0 = arith.constant 0 : i32
    %c0_i32_1 = arith.constant 0 : i32
    return %arg1, %c0_i32, %1, %c0_i32_0 : i32, i32, i32, i32
  }
  func.func @transform_1(%arg0: i32, %arg1: i32, %arg2: i32) -> (i32, i32, i32, i32) {
    %c1_i32 = arith.constant 1 : i32
    %0 = arith.muli %arg0, %c1_i32 : i32
    %1 = arith.addi %0, %arg2 : i32
    %c1_i32_0 = arith.constant 1 : i32
    %c0_i32 = arith.constant 0 : i32
    %c0_i32_1 = arith.constant 0 : i32
    return %arg1, %c1_i32_0, %1, %c0_i32 : i32, i32, i32, i32
  }
  func.func @transform_2(%arg0: i32, %arg1: i32, %arg2: i32) -> (i32, i32, i32, i32) {
    %c1_i32 = arith.constant 1 : i32
    %0 = arith.muli %arg0, %c1_i32 : i32
    %1 = arith.addi %0, %arg2 : i32
    %c0_i32 = arith.constant 0 : i32
    %c0_i32_0 = arith.constant 0 : i32
    %c0_i32_1 = arith.constant 0 : i32
    return %arg1, %c0_i32, %1, %c0_i32_0 : i32, i32, i32, i32
  }
  func.func @transform_3(%arg0: i32, %arg1: i32, %arg2: i32) -> (i32, i32, i32, i32) {
    %c1_i32 = arith.constant 1 : i32
    %0 = arith.muli %arg0, %c1_i32 : i32
    %1 = arith.addi %0, %arg2 : i32
    %c0_i32 = arith.constant 0 : i32
    %c0_i32_0 = arith.constant 0 : i32
    %c0_i32_1 = arith.constant 0 : i32
    return %arg1, %c0_i32, %1, %c0_i32_0 : i32, i32, i32, i32
  }
  func.func @transform_4(%arg0: i32, %arg1: i32, %arg2: i32) -> (i32, i32, i32) {
    %c1_i32 = arith.constant 1 : i32
    %0 = arith.muli %arg0, %c1_i32 : i32
    %1 = arith.addi %0, %arg2 : i32
    %c0_i32 = arith.constant 0 : i32
    %c0_i32_0 = arith.constant 0 : i32
    return %arg1, %1, %c0_i32 : i32, i32, i32
  }
  func.func @transform_5(%arg0: i32, %arg1: i32, %arg2: i32) -> (i32, i32, i32, i32) {
    %c0_i32 = arith.constant 0 : i32
    %c0_i32_0 = arith.constant 0 : i32
    %c0_i32_1 = arith.constant 0 : i32
    return %arg0, %arg1, %c0_i32, %c0_i32_0 : i32, i32, i32, i32
  }
  func.func @transform_6(%arg0: i32, %arg1: i32, %arg2: i32) -> (i32, i32, i32, i32) {
    %c0_i32 = arith.constant 0 : i32
    %c0_i32_0 = arith.constant 0 : i32
    %c0_i32_1 = arith.constant 0 : i32
    return %arg0, %arg1, %c0_i32, %c0_i32_0 : i32, i32, i32, i32
  }
}

</mosaic_0001>

<llo_original>
// kernel: tpu_custom_call.1
$region0: #{tpu_custom_call.1}
  #allocation0 [shape = 'u32[]', space=smem, size = 0x4, offset = 0x4, fixed_abs, tag = 'smem constant byte address 0x4 - core index']
  #allocation1 [shape = 'u32[144,128]{1,0:T(1,128)}', space=vmem, size = 0x12000, scoped, tag = 'internal scratch']
  %s0 = inlined_call_operand.hbm [shape: f32[2,2,8,128], index: 0, kind: input, shape index: {}]
  %s1 = inlined_call_operand.hbm [shape: f32[2,2,8,128], index: 1, kind: input, shape index: {}]
  %s2 = inlined_call_operand.hbm [shape: f32[2,1,8,128], index: 2, kind: input, shape index: {}]
  %s3 = inlined_call_operand.hbm [shape: f32[2,1,8,128], index: 3, kind: input, shape index: {}]
  %s4 = inlined_call_operand.hbm [shape: f32[2,8,128], index: 4, kind: input, shape index: {}]
  %s5 = inlined_call_operand.hbm [shape: f32[1,2,8,128], index: 5, kind: output, shape index: {0}]
  %s6 = inlined_call_operand.hbm [shape: f32[1,2,8,128], index: 6, kind: output, shape index: {1}]
  %7 = xla_tuple %s5, %s6
  %s8 = sld [smem:[#allocation0]]
  $region85: #{tpu_custom_call.1} parent=0
    _
  %s10 = ssub.s32 1, %s8
  %s11 = scalar_select 0, %s10, %s8
  $region1: #{tpu_custom_call.1} parent=0
    #allocation2 [shape = 'u8[8192]{0}', space=vmem, size = 0x2000, scoped, tag = 'input window, operand 0']
    #allocation3 [shape = 's32[2]{0}', space=sflag, size = 0x8, scoped, tag = 'scoped memory for tpu_custom_call.1']
    #allocation4 [shape = 's32[2]{0}', space=sflag, size = 0x8, scoped, tag = 'scoped memory for tpu_custom_call.1']
    #allocation5 [shape = 'u8[8192]{0}', space=vmem, size = 0x2000, scoped, tag = 'input window, operand 1']
    #allocation6 [shape = 's32[2]{0}', space=sflag, size = 0x8, scoped, tag = 'scoped memory for tpu_custom_call.1']
    #allocation7 [shape = 'u8[8192]{0}', space=vmem, size = 0x2000, scoped, tag = 'input window, operand 2']
    #allocation8 [shape = 'u8[8192]{0}', space=vmem, size = 0x2000, scoped, tag = 'input window, operand 3']
    #allocation9 [shape = 's32[2]{0}', space=sflag, size = 0x8, scoped, tag = 'scoped memory for tpu_custom_call.1']
    #allocation10 [shape = 'u8[8192]{0}', space=vmem, size = 0x2000, scoped, tag = 'input window, operand 4']
    #allocation11 [shape = 'u8[8192]{0}', space=vmem, size = 0x2000, scoped, tag = 'output window, operand 0']
    #allocation12 [shape = 'u8[8192]{0}', space=vmem, size = 0x2000, scoped, tag = 'output window, operand 1']
    #allocation13 [shape = 's32[2]{0}', space=sflag, size = 0x8, scoped, tag = 'scoped memory for tpu_custom_call.1']
    %12 = vsyncpa [#allocation3], 0
    %s13 = scalar_lea.sflag [#allocation3], 1
    %14 = vsyncpa %s13, 0
    %15 = vsyncpa [#allocation6], 0
    %s16 = scalar_lea.sflag [#allocation6], 1
    %17 = vsyncpa %s16, 0
    %18 = vsyncpa [#allocation9], 0
    %s19 = scalar_lea.sflag [#allocation9], 1
    %20 = vsyncpa %s19, 0
    %21 = vsyncpa [#allocation4], 0
    %s22 = scalar_lea.sflag [#allocation4], 1
    %23 = vsyncpa %s22, 0
    %24 = vsyncpa [#allocation13], 0
    %s25 = scalar_lea.sflag [#allocation13], 1
    %26 = vsyncpa %s25, 0
    loop: start=0, step=1, limit=4
    $region2: #{tpu_custom_call.1} parent=1 // loop_pre_header
      _
    $region3: #{tpu_custom_call.1} parent=1 // loop_header
      %s28 = sphi 0, %s32
      %p29 = scmp.ge.s32.totalorder %s28, 4
      %s35 = sphi 0, %s54
      %s36 = sphi 0, %s50
      %s37 = sphi 0, %s46
      %s38 = sphi 0, %s35
      %s39 = sphi 0, %s36
      %s40 = sphi 0, %s37
      %s41 = sphi 0, %s38
      %s42 = sphi 0, %s39
      %s43 = sphi 0, %s40
      %s61 = sphi 0, %s63
      %s64 = sphi 0, %s61
      %s65 = sphi 0, %s64
      %s81 = sphi 0, %s65
      %s91 = sphi 0, %s93
      %s94 = sphi 0, %s91
      %s95 = sphi 0, %s94
      %s111 = sphi 0, %s95
      %s121 = sphi 0, %s123
      %s124 = sphi 0, %s121
      %s125 = sphi 0, %s124
      %s141 = sphi 0, %s125
      %s151 = sphi 0, %s153
      %s154 = sphi 0, %s151
      %s155 = sphi 0, %s154
      %s171 = sphi 0, %s155
      %s181 = sphi 0, %s183
      %s184 = sphi 0, %s181
      %s185 = sphi 0, %s184
      %s201 = sphi 0, %s185
      %s209 = sphi 0, %s211
      %s212 = sphi 0, %s209
      %s213 = sphi 0, %s212
      %s229 = sphi 0, %s213
      %s237 = sphi 0, %s239
      %s240 = sphi 0, %s237
      %s241 = sphi 0, %s240
      %s257 = sphi 0, %s241
    $region4: #{tpu_custom_call.1} parent=1 // loop_header_branch
      %31 = sbr.rel (%p29) target = $region8
    $region5: #{tpu_custom_call.1} parent=1 // loop_body
      %s33 = ssub.s32 %s28, 1
      %s34 = ssub.s32 %s28, 2
      %s44 = sadd.s32 1, %s37
      %p45 = scmp.ge.s32.totalorder %s44, 1
      %s46 = scalar_select %p45, 0, %s44
      %s47 = sadd.s32 1, %s36
      %s48 = scalar_select %p45, %s47, %s36
      %p49 = scmp.ge.s32.totalorder %s48, 2
      %s50 = scalar_select %p49, 0, %s48
      %s51 = sadd.s32 1, %s35
      %s52 = scalar_select %p49, %s51, %s35
      %p53 = scmp.ge.s32.totalorder %s52, 1
      %s54 = scalar_select %p53, 0, %s52
      %s55 = sadd.s32 %s35, %s37
      %s56 = sadd.s32 %s54, %s46
      %s57 = ssub.s32 %s36, %s50
      %s58 = ssub.s32 %s55, %s56
      %s59 = sor.u32 %s57, %s58
      %p60 = scmp.eq.s32.totalorder %s59, 0
      %s62 = sadd.s32 %s61, 1
      %s63 = scalar_select %p60, %s61, %s62
      %p66 = pneg %p60
      %p67 = scmp.eq.s32.totalorder %s28, 1
      %p68 = por %p66, %p67
      %p69 = scmp.ne.s32.totalorder %s61, %s64
      %p70 = scmp.eq.s32.totalorder %s28, 0
      %p71 = por %p69, %p70
      %p72 = scmp.ne.s32.totalorder %s61, %s64
      %p73 = scmp.eq.s32.totalorder %s33, 1
      %p74 = por %p72, %p73
      %p75 = scmp.ne.s32.totalorder %s64, %s65
      %p76 = scmp.eq.s32.totalorder %s33, 0
      %p77 = por %p75, %p76
      %p78 = scmp.ne.s32.totalorder %s64, %s65
      %p79 = scmp.eq.s32.totalorder %s34, 1
      %p80 = por %p78, %p79
      %p82 = scmp.ne.s32.totalorder %s65, %s81
      %p83 = scmp.eq.s32.totalorder %s34, 0
      %p84 = por %p82, %p83
      %s85 = sadd.s32 %s35, %s37
      %s86 = sadd.s32 %s54, %s46
      %s87 = ssub.s32 %s36, %s50
      %s88 = ssub.s32 %s85, %s86
      %s89 = sor.u32 %s87, %s88
      %p90 = scmp.eq.s32.totalorder %s89, 0
      %s92 = sadd.s32 %s91, 1
      %s93 = scalar_select %p90, %s91, %s92
      %p96 = pneg %p90
      %p97 = scmp.eq.s32.totalorder %s28, 1
      %p98 = por %p96, %p97
      %p99 = scmp.ne.s32.totalorder %s91, %s94
      %p100 = scmp.eq.s32.totalorder %s28, 0
      %p101 = por %p99, %p100
      %p102 = scmp.ne.s32.totalorder %s91, %s94
      %p103 = scmp.eq.s32.totalorder %s33, 1
      %p104 = por %p102, %p103
      %p105 = scmp.ne.s32.totalorder %s94, %s95
      %p106 = scmp.eq.s32.totalorder %s33, 0
      %p107 = por %p105, %p106
      %p108 = scmp.ne.s32.totalorder %s94, %s95
      %p109 = scmp.eq.s32.totalorder %s34, 1
      %p110 = por %p108, %p109
      %p112 = scmp.ne.s32.totalorder %s95, %s111
      %p113 = scmp.eq.s32.totalorder %s34, 0
      %p114 = por %p112, %p113
      %s115 = sadd.s32 %s35, %s37
      %s116 = sadd.s32 %s54, %s46
      %s117 = ssub.s32 %s36, %s50
      %s118 = ssub.s32 %s115, %s116
      %s119 = sor.u32 %s117, %s118
      %p120 = scmp.eq.s32.totalorder %s119, 0
      %s122 = sadd.s32 %s121, 1
      %s123 = scalar_select %p120, %s121, %s122
      %p126 = pneg %p120
      %p127 = scmp.eq.s32.totalorder %s28, 1
      %p128 = por %p126, %p127
      %p129 = scmp.ne.s32.totalorder %s121, %s124
      %p130 = scmp.eq.s32.totalorder %s28, 0
      %p131 = por %p129, %p130
      %p132 = scmp.ne.s32.totalorder %s121, %s124
      %p133 = scmp.eq.s32.totalorder %s33, 1
      %p134 = por %p132, %p133
      %p135 = scmp.ne.s32.totalorder %s124, %s125
      %p136 = scmp.eq.s32.totalorder %s33, 0
      %p137 = por %p135, %p136
      %p138 = scmp.ne.s32.totalorder %s124, %s125
      %p139 = scmp.eq.s32.totalorder %s34, 1
      %p140 = por %p138, %p139
      %p142 = scmp.ne.s32.totalorder %s125, %s141
      %p143 = scmp.eq.s32.totalorder %s34, 0
      %p144 = por %p142, %p143
      %s145 = sadd.s32 %s35, %s37
      %s146 = sadd.s32 %s54, %s46
      %s147 = ssub.s32 %s36, %s50
      %s148 = ssub.s32 %s145, %s146
      %s149 = sor.u32 %s147, %s148
      %p150 = scmp.eq.s32.totalorder %s149, 0
      %s152 = sadd.s32 %s151, 1
      %s153 = scalar_select %p150, %s151, %s152
      %p156 = pneg %p150
      %p157 = scmp.eq.s32.totalorder %s28, 1
      %p158 = por %p156, %p157
      %p159 = scmp.ne.s32.totalorder %s151, %s154
      %p160 = scmp.eq.s32.totalorder %s28, 0
      %p161 = por %p159, %p160
      %p162 = scmp.ne.s32.totalorder %s151, %s154
      %p163 = scmp.eq.s32.totalorder %s33, 1
      %p164 = por %p162, %p163
      %p165 = scmp.ne.s32.totalorder %s154, %s155
      %p166 = scmp.eq.s32.totalorder %s33, 0
      %p167 = por %p165, %p166
      %p168 = scmp.ne.s32.totalorder %s154, %s155
      %p169 = scmp.eq.s32.totalorder %s34, 1
      %p170 = por %p168, %p169
      %p172 = scmp.ne.s32.totalorder %s155, %s171
      %p173 = scmp.eq.s32.totalorder %s34, 0
      %p174 = por %p172, %p173
      %s175 = sadd.s32 %s35, %s37
      %s176 = sadd.s32 %s54, %s46
      %s177 = ssub.s32 %s36, %s50
      %s178 = ssub.s32 %s175, %s176
      %s179 = sor.u32 %s177, %s178
      %p180 = scmp.eq.s32.totalorder %s179, 0
      %s182 = sadd.s32 %s181, 1
      %s183 = scalar_select %p180, %s181, %s182
      %p186 = pneg %p180
      %p187 = scmp.eq.s32.totalorder %s28, 1
      %p188 = por %p186, %p187
      %p189 = scmp.ne.s32.totalorder %s181, %s184
      %p190 = scmp.eq.s32.totalorder %s28, 0
      %p191 = por %p189, %p190
      %p192 = scmp.ne.s32.totalorder %s181, %s184
      %p193 = scmp.eq.s32.totalorder %s33, 1
      %p194 = por %p192, %p193
      %p195 = scmp.ne.s32.totalorder %s184, %s185
      %p196 = scmp.eq.s32.totalorder %s33, 0
      %p197 = por %p195, %p196
      %p198 = scmp.ne.s32.totalorder %s184, %s185
      %p199 = scmp.eq.s32.totalorder %s34, 1
      %p200 = por %p198, %p199
      %p202 = scmp.ne.s32.totalorder %s185, %s201
      %p203 = scmp.eq.s32.totalorder %s34, 0
      %p204 = por %p202, %p203
      %s205 = ssub.s32 %s35, %s54
      %s206 = ssub.s32 %s36, %s50
      %s207 = sor.u32 %s205, %s206
      %p208 = scmp.eq.s32.totalorder %s207, 0
      %s210 = sadd.s32 %s209, 1
      %s211 = scalar_select %p208, %s209, %s210
      %p214 = pneg %p208
      %p215 = scmp.eq.s32.totalorder %s28, 1
      %p216 = por %p214, %p215
      %p217 = scmp.ne.s32.totalorder %s209, %s212
      %p218 = scmp.eq.s32.totalorder %s28, 0
      %p219 = por %p217, %p218
      %p220 = scmp.ne.s32.totalorder %s209, %s212
      %p221 = scmp.eq.s32.totalorder %s33, 1
      %p222 = por %p220, %p221
      %p223 = scmp.ne.s32.totalorder %s212, %s213
      %p224 = scmp.eq.s32.totalorder %s33, 0
      %p225 = por %p223, %p224
      %p226 = scmp.ne.s32.totalorder %s212, %s213
      %p227 = scmp.eq.s32.totalorder %s34, 1
      %p228 = por %p226, %p227
      %p230 = scmp.ne.s32.totalorder %s213, %s229
      %p231 = scmp.eq.s32.totalorder %s34, 0
      %p232 = por %p230, %p231
      %s233 = ssub.s32 %s35, %s54
      %s234 = ssub.s32 %s36, %s50
      %s235 = sor.u32 %s233, %s234
      %p236 = scmp.eq.s32.totalorder %s235, 0
      %s238 = sadd.s32 %s237, 1
      %s239 = scalar_select %p236, %s237, %s238
      %p242 = pneg %p236
      %p243 = scmp.eq.s32.totalorder %s28, 1
      %p244 = por %p242, %p243
      %p245 = scmp.ne.s32.totalorder %s237, %s240
      %p246 = scmp.eq.s32.totalorder %s28, 0
      %p247 = por %p245, %p246
      %p248 = scmp.ne.s32.totalorder %s237, %s240
      %p249 = scmp.eq.s32.totalorder %s33, 1
      %p250 = por %p248, %p249
      %p251 = scmp.ne.s32.totalorder %s240, %s241
      %p252 = scmp.eq.s32.totalorder %s33, 0
      %p253 = por %p251, %p252
      %p254 = scmp.ne.s32.totalorder %s240, %s241
      %p255 = scmp.eq.s32.totalorder %s34, 1
      %p256 = por %p254, %p255
      %p258 = scmp.ne.s32.totalorder %s241, %s257
      %p259 = scmp.eq.s32.totalorder %s34, 0
      %p260 = por %p258, %p259
      %p261 = scmp.le.s32.totalorder 1, %s28
      %p262 = scmp.lt.s32.totalorder %s28, 3
      %p263 = pnand %p261, %p262
      %p264 = pneg %p263
      // Predicated region
      $region9: #{tpu_custom_call.1} parent=5 // pred_check
        _
      $region10: #{tpu_custom_call.1} parent=5 // pred_check_branch
        %266 = sbr.rel (%p263) target = $region12
      $region11: #{tpu_custom_call.1} parent=5 // pred_region
        %s267 = ssub.s32 %s28, 1
      $region12: #{tpu_custom_call.1} parent=5 // pred_fallthru
        _
      %p268 = scmp.lt.s32.totalorder %s28, 2
      // Predicated region
      $region13: #{tpu_custom_call.1} parent=5 // pred_check
        %p269 = pneg %p268
      $region14: #{tpu_custom_call.1} parent=5 // pred_check_branch
        %271 = sbr.rel (%p269) target = $region16
      $region15: #{tpu_custom_call.1} parent=5 // pred_region
        // Predicated region
        $region17: #{tpu_custom_call.1} parent=15 // pred_check
          %p272 = pneg %p71
        $region18: #{tpu_custom_call.1} parent=15 // pred_check_branch
          %274 = sbr.rel (%p272) target = $region20
        $region19: #{tpu_custom_call.1} parent=15 // pred_region
          %s275 = sand.u32 %s61, 1
          %s276 = scalar_lea.sflag [#allocation3], %s275
          %s277 = sand.u32 %s61, 1
          %s278 = smul.addr %s277, 8
          %s279 = scalar_lea.vmem [#allocation2], %s278
          %s280 = sadd.s32 %s35, %s37
          %s282 = ssub.s32 128, 128
          %283 = vsyncadd %s276, %s282
          %s284 = smul.addr %s36, 2
          %s285 = sadd.s32 %s280, %s284
          %s286 = smul.addr %s285, 128
          %s287 = scalar_lea.hbm %s0, %s286
          %s289 = sshll.u32 %s279, 4
          %s290 = int_to_ptr.vmem [resolvable:$true] %s289
          %292 = dma.hbm_to_vmem [thread:$0]  %s287, 128, %s290, %s276
        $region20: #{tpu_custom_call.1} parent=15 // pred_fallthru
          _
        // Predicated region
        $region21: #{tpu_custom_call.1} parent=15 // pred_check
          %p293 = pneg %p101
        $region22: #{tpu_custom_call.1} parent=15 // pred_check_branch
          %295 = sbr.rel (%p293) target = $region24
        $region23: #{tpu_custom_call.1} parent=15 // pred_region
          %s296 = sand.u32 %s28, 1
          %s297 = scalar_lea.sflag [#allocation6], %s296
          %s298 = sand.u32 %s91, 1
          %s299 = smul.addr %s298, 8
          %s300 = scalar_lea.vmem [#allocation5], %s299
          %s301 = sadd.s32 %s35, %s37
          %s303 = ssub.s32 128, 128
          %304 = vsyncadd %s297, %s303
          %s305 = sadd.s32 %s301, 1
          %s306 = smul.addr %s36, 2
          %s307 = sadd.s32 %s305, %s306
          %s308 = smul.addr %s307, 128
          %s309 = scalar_lea.hbm %s1, %s308
          %s311 = sshll.u32 %s300, 4
          %s312 = int_to_ptr.vmem [resolvable:$true] %s311
          %314 = dma.hbm_to_vmem [thread:$0]  %s309, 128, %s312, %s297
        $region24: #{tpu_custom_call.1} parent=15 // pred_fallthru
          _
        // Predicated region
        $region25: #{tpu_custom_call.1} parent=15 // pred_check
          %p315 = pneg %p131
        $region26: #{tpu_custom_call.1} parent=15 // pred_check_branch
          %317 = sbr.rel (%p315) target = $region28
        $region27: #{tpu_custom_call.1} parent=15 // pred_region
          %s318 = sand.u32 %s28, 1
          %s319 = scalar_lea.sflag [#allocation6], %s318
          %s320 = sand.u32 %s121, 1
          %s321 = smul.addr %s320, 8
          %s322 = scalar_lea.vmem [#allocation7], %s321
          %s323 = sadd.s32 %s35, %s37
          %s325 = ssub.s32 128, 128
          %326 = vsyncadd %s319, %s325
          %s327 = sadd.s32 %s323, %s36
          %s328 = smul.addr %s327, 128
          %s329 = scalar_lea.hbm %s2, %s328
          %s331 = sshll.u32 %s322, 4
          %s332 = int_to_ptr.vmem [resolvable:$true] %s331
          %334 = dma.hbm_to_vmem [thread:$0]  %s329, 128, %s332, %s319
        $region28: #{tpu_custom_call.1} parent=15 // pred_fallthru
          _
        // Predicated region
        $region29: #{tpu_custom_call.1} parent=15 // pred_check
          %p335 = pneg %p161
        $region30: #{tpu_custom_call.1} parent=15 // pred_check_branch
          %337 = sbr.rel (%p335) target = $region32
        $region31: #{tpu_custom_call.1} parent=15 // pred_region
          %s338 = sand.u32 %s28, 1
          %s339 = scalar_lea.sflag [#allocation9], %s338
          %s340 = sand.u32 %s151, 1
          %s341 = smul.addr %s340, 8
          %s342 = scalar_lea.vmem [#allocation8], %s341
          %s343 = sadd.s32 %s35, %s37
          %s345 = ssub.s32 128, 128
          %346 = vsyncadd %s339, %s345
          %s347 = sadd.s32 %s343, %s36
          %s348 = smul.addr %s347, 128
          %s349 = scalar_lea.hbm %s3, %s348
          %s351 = sshll.u32 %s342, 4
          %s352 = int_to_ptr.vmem [resolvable:$true] %s351
          %354 = dma.hbm_to_vmem [thread:$0]  %s349, 128, %s352, %s339
        $region32: #{tpu_custom_call.1} parent=15 // pred_fallthru
          _
        // Predicated region
        $region33: #{tpu_custom_call.1} parent=15 // pred_check
          %p355 = pneg %p191
        $region34: #{tpu_custom_call.1} parent=15 // pred_check_branch
          %357 = sbr.rel (%p355) target = $region36
        $region35: #{tpu_custom_call.1} parent=15 // pred_region
          %s358 = sand.u32 %s28, 1
          %s359 = scalar_lea.sflag [#allocation9], %s358
          %s360 = sand.u32 %s181, 1
          %s361 = smul.addr %s360, 8
          %s362 = scalar_lea.vmem [#allocation10], %s361
          %s363 = sadd.s32 %s35, %s37
          %s365 = ssub.s32 128, 128
          %366 = vsyncadd %s359, %s365
          %s367 = sadd.s32 %s363, %s36
          %s368 = smul.addr %s367, 128
          %s369 = scalar_lea.hbm %s4, %s368
          %s371 = sshll.u32 %s362, 4
          %s372 = int_to_ptr.vmem [resolvable:$true] %s371
          %374 = dma.hbm_to_vmem [thread:$0]  %s369, 128, %s372, %s359
        $region36: #{tpu_custom_call.1} parent=15 // pred_fallthru
          _
      $region16: #{tpu_custom_call.1} parent=5 // pred_fallthru
        _
      %p375 = scmp.le.s32.totalorder 1, %s28
      %p376 = scmp.lt.s32.totalorder %s28, 3
      %p377 = pnand %p375, %p376
      %p378 = pneg %p377
      // Predicated region
      $region37: #{tpu_custom_call.1} parent=5 // pred_check
        _
      $region38: #{tpu_custom_call.1} parent=5 // pred_check_branch
        %380 = sbr.rel (%p377) target = $region40
      $region39: #{tpu_custom_call.1} parent=5 // pred_region
        %s381 = ssub.s32 %s28, 1
        %s382 = sand.u32 %s64, 1
        %s383 = scalar_lea.sflag [#allocation3], %s382
        %s384 = sand.u32 %s64, 1
        %s385 = smul.addr %s384, 8
        %s386 = scalar_lea.vmem [#allocation2], %s385
        // Predicated region
        $region41: #{tpu_custom_call.1} parent=39 // pred_check
          %p387 = pneg %p77
        $region42: #{tpu_custom_call.1} parent=39 // pred_check_branch
          %389 = sbr.rel (%p387) target = $region44
        $region43: #{tpu_custom_call.1} parent=39 // pred_region
          %390 = dma.done %s383, 128
        $region44: #{tpu_custom_call.1} parent=39 // pred_fallthru
          _
        %s391 = sand.u32 %s33, 1
        %s392 = scalar_lea.sflag [#allocation6], %s391
        %s393 = sand.u32 %s94, 1
        %s394 = smul.addr %s393, 8
        %s395 = scalar_lea.vmem [#allocation5], %s394
        // Predicated region
        $region45: #{tpu_custom_call.1} parent=39 // pred_check
          %p396 = pneg %p107
        $region46: #{tpu_custom_call.1} parent=39 // pred_check_branch
          %398 = sbr.rel (%p396) target = $region48
        $region47: #{tpu_custom_call.1} parent=39 // pred_region
          %399 = dma.done %s392, 128
        $region48: #{tpu_custom_call.1} parent=39 // pred_fallthru
          _
        %s400 = sand.u32 %s33, 1
        %s401 = scalar_lea.sflag [#allocation6], %s400
        %s402 = sand.u32 %s124, 1
        %s403 = smul.addr %s402, 8
        %s404 = scalar_lea.vmem [#allocation7], %s403
        // Predicated region
        $region49: #{tpu_custom_call.1} parent=39 // pred_check
          %p405 = pneg %p137
        $region50: #{tpu_custom_call.1} parent=39 // pred_check_branch
          %407 = sbr.rel (%p405) target = $region52
        $region51: #{tpu_custom_call.1} parent=39 // pred_region
          %408 = dma.done %s401, 128
        $region52: #{tpu_custom_call.1} parent=39 // pred_fallthru
          _
        %s409 = sand.u32 %s33, 1
        %s410 = scalar_lea.sflag [#allocation9], %s409
        %s411 = sand.u32 %s154, 1
        %s412 = smul.addr %s411, 8
        %s413 = scalar_lea.vmem [#allocation8], %s412
        // Predicated region
        $region53: #{tpu_custom_call.1} parent=39 // pred_check
          %p414 = pneg %p167
        $region54: #{tpu_custom_call.1} parent=39 // pred_check_branch
          %416 = sbr.rel (%p414) target = $region56
        $region55: #{tpu_custom_call.1} parent=39 // pred_region
          %417 = dma.done %s410, 128
        $region56: #{tpu_custom_call.1} parent=39 // pred_fallthru
          _
        %s418 = sand.u32 %s33, 1
        %s419 = scalar_lea.sflag [#allocation9], %s418
        %s420 = sand.u32 %s184, 1
        %s421 = smul.addr %s420, 8
        %s422 = scalar_lea.vmem [#allocation10], %s421
        // Predicated region
        $region57: #{tpu_custom_call.1} parent=39 // pred_check
          %p423 = pneg %p197
        $region58: #{tpu_custom_call.1} parent=39 // pred_check_branch
          %425 = sbr.rel (%p423) target = $region60
        $region59: #{tpu_custom_call.1} parent=39 // pred_region
          %426 = dma.done %s419, 128
        $region60: #{tpu_custom_call.1} parent=39 // pred_fallthru
          _
        %s427 = sand.u32 %s64, 1
        %s428 = scalar_lea.sflag [#allocation3], %s427
        %s429 = sand.u32 %s64, 1
        %s430 = smul.addr %s429, 8
        %s431 = scalar_lea.vmem [#allocation2], %s430
        %p432 = pneg %p77
        %p433 = pneg %p74
        %s434 = sand.u32 %s33, 1
        %s435 = scalar_lea.sflag [#allocation6], %s434
        %s436 = sand.u32 %s94, 1
        %s437 = smul.addr %s436, 8
        %s438 = scalar_lea.vmem [#allocation5], %s437
        %p439 = pneg %p107
        %p440 = pneg %p104
        %s441 = sand.u32 %s33, 1
        %s442 = scalar_lea.sflag [#allocation6], %s441
        %s443 = sand.u32 %s124, 1
        %s444 = smul.addr %s443, 8
        %s445 = scalar_lea.vmem [#allocation7], %s444
        %p446 = pneg %p137
        %p447 = pneg %p134
        %s448 = sand.u32 %s33, 1
        %s449 = scalar_lea.sflag [#allocation9], %s448
        %s450 = sand.u32 %s154, 1
        %s451 = smul.addr %s450, 8
        %s452 = scalar_lea.vmem [#allocation8], %s451
        %p453 = pneg %p167
        %p454 = pneg %p164
        %s455 = sand.u32 %s33, 1
        %s456 = scalar_lea.sflag [#allocation9], %s455
        %s457 = sand.u32 %s184, 1
        %s458 = smul.addr %s457, 8
        %s459 = scalar_lea.vmem [#allocation10], %s458
        %p460 = pneg %p197
        %p461 = pneg %p194
        %p462 = pneg %p225
        %p463 = pneg %p222
        %s464 = sand.u32 %s212, 1
        %s465 = scalar_lea.sflag [#allocation4], %s464
        %s466 = sand.u32 %s212, 1
        %s467 = smul.addr %s466, 8
        %s468 = scalar_lea.vmem [#allocation11], %s467
        %p469 = pneg %p253
        %p470 = pneg %p250
        %s471 = sand.u32 %s240, 1
        %s472 = scalar_lea.sflag [#allocation13], %s471
        %s473 = sand.u32 %s240, 1
        %s474 = smul.addr %s473, 8
        %s475 = scalar_lea.vmem [#allocation12], %s474
        %s476 = sadd.s32 %s38, %s40
        %s477 = sadd.s32 %s38, %s40
        %s478 = sadd.s32 %s38, %s40
        %s479 = sadd.s32 %s38, %s40
        %s480 = sadd.s32 %s38, %s40
        %p481 = scmp.eq.s32.totalorder %s40, 0
        // Predicated region
        $region61: #{tpu_custom_call.1} parent=39 // pred_check
          %p482 = pneg %p481
        $region62: #{tpu_custom_call.1} parent=39 // pred_check_branch
          %484 = sbr.rel (%p482) target = $region64
        $region63: #{tpu_custom_call.1} parent=39 // pred_region
          %485 = vst [vmem:[%s468] sm:$0xff] 0.0
          %486 = vst [vmem:[%s475] sm:$0xff] 0.0
        $region64: #{tpu_custom_call.1} parent=39 // pred_fallthru
          _
        %v487 = vld [vmem:[%s422] sm:$0xff]
        %v488 = vld [vmem:[%s386] sm:$0xff]
        %v489 = vld [vmem:[%s404] sm:$0xff]
        %v490 = vsub.f32 %v488, %v489
        %v491 = vand.u32 2147483647, %v490
        %v492 = vmul.f32 %v491, %v487
        %v493 = vld [vmem:[%s395] sm:$0xff]
        %v494 = vld [vmem:[%s413] sm:$0xff]
        %v495 = vsub.f32 %v493, %v494
        %v496 = vand.u32 2147483647, %v495
        %v497 = vmul.f32 %v496, %v487
        %v498 = vadd.f32 %v492, 0.0
        %v499 = vadd.f32 %v497, 0.0
        %v500 = vld [vmem:[%s468] sm:$0xff]
        %v501 = vadd.f32 %v500, %v498
        %502 = vst [vmem:[%s468] sm:$0xff] %v501
        %v503 = vld [vmem:[%s475] sm:$0xff]
        %v504 = vadd.f32 %v503, %v499
        %505 = vst [vmem:[%s475] sm:$0xff] %v504
        %s506 = sand.u32 %s212, 1
        %s507 = scalar_lea.sflag [#allocation4], %s506
        %s508 = sand.u32 %s212, 1
        %s509 = smul.addr %s508, 8
        %s510 = scalar_lea.vmem [#allocation11], %s509
        %s511 = sand.u32 %s240, 1
        %s512 = scalar_lea.sflag [#allocation13], %s511
        %s513 = sand.u32 %s240, 1
        %s514 = smul.addr %s513, 8
        %s515 = scalar_lea.vmem [#allocation12], %s514
        // Predicated region
        $region65: #{tpu_custom_call.1} parent=39 // pred_check
          %p516 = pneg %p222
        $region66: #{tpu_custom_call.1} parent=39 // pred_check_branch
          %518 = sbr.rel (%p516) target = $region68
        $region67: #{tpu_custom_call.1} parent=39 // pred_region
          %s520 = ssub.s32 128, 128
          %521 = vsyncadd %s507, %s520
          %s522 = smul.addr %s38, 2
          %s523 = sadd.s32 %s39, %s522
          %s524 = smul.addr %s523, 128
          %s525 = scalar_lea.hbm %s5, %s524
          %s527 = sshll.u32 %s510, 4
          %s528 = int_to_ptr.vmem [resolvable:$true] %s527
          %530 = dma.vmem_to_hbm [thread:$0]  %s528, 128, %s525, %s507
        $region68: #{tpu_custom_call.1} parent=39 // pred_fallthru
          _
        // Predicated region
        $region69: #{tpu_custom_call.1} parent=39 // pred_check
          %p531 = pneg %p250
        $region70: #{tpu_custom_call.1} parent=39 // pred_check_branch
          %533 = sbr.rel (%p531) target = $region72
        $region71: #{tpu_custom_call.1} parent=39 // pred_region
          %s535 = ssub.s32 128, 128
          %536 = vsyncadd %s512, %s535
          %s537 = smul.addr %s38, 2
          %s538 = sadd.s32 %s39, %s537
          %s539 = smul.addr %s538, 128
          %s540 = scalar_lea.hbm %s6, %s539
          %s542 = sshll.u32 %s515, 4
          %s543 = int_to_ptr.vmem [resolvable:$true] %s542
          %545 = dma.vmem_to_hbm [thread:$0]  %s543, 128, %s540, %s512
        $region72: #{tpu_custom_call.1} parent=39 // pred_fallthru
          _
      $region40: #{tpu_custom_call.1} parent=5 // pred_fallthru
        _
      %p546 = scmp.le.s32.totalorder 2, %s28
      // Predicated region
      $region73: #{tpu_custom_call.1} parent=5 // pred_check
        %p547 = pneg %p546
      $region74: #{tpu_custom_call.1} parent=5 // pred_check_branch
        %549 = sbr.rel (%p547) target = $region76
      $region75: #{tpu_custom_call.1} parent=5 // pred_region
        %s550 = ssub.s32 %s28, 2
        // Predicated region
        $region77: #{tpu_custom_call.1} parent=75 // pred_check
          %p551 = pneg %p228
        $region78: #{tpu_custom_call.1} parent=75 // pred_check_branch
          %553 = sbr.rel (%p551) target = $region80
        $region79: #{tpu_custom_call.1} parent=75 // pred_region
          %s554 = sand.u32 %s213, 1
          %s555 = scalar_lea.sflag [#allocation4], %s554
          %s556 = sand.u32 %s213, 1
          %s557 = smul.addr %s556, 8
          %s558 = scalar_lea.vmem [#allocation11], %s557
          %559 = dma.done %s555, 128
        $region80: #{tpu_custom_call.1} parent=75 // pred_fallthru
          _
        // Predicated region
        $region81: #{tpu_custom_call.1} parent=75 // pred_check
          %p560 = pneg %p256
        $region82: #{tpu_custom_call.1} parent=75 // pred_check_branch
          %562 = sbr.rel (%p560) target = $region84
        $region83: #{tpu_custom_call.1} parent=75 // pred_region
          %s563 = sand.u32 %s241, 1
          %s564 = scalar_lea.sflag [#allocation13], %s563
          %s565 = sand.u32 %s241, 1
          %s566 = smul.addr %s565, 8
          %s567 = scalar_lea.vmem [#allocation12], %s566
          %568 = dma.done %s564, 128
        $region84: #{tpu_custom_call.1} parent=75 // pred_fallthru
          _
      $region76: #{tpu_custom_call.1} parent=5 // pred_fallthru
        _
    $region6: #{tpu_custom_call.1} parent=1 // loop_footer
      %s32 = sadd.s32 1, %s28
    $region7: #{tpu_custom_call.1} parent=1 // loop_footer_branch
      %27 = sbr.rel target = $region3
    $region8: #{tpu_custom_call.1} parent=1 // loop_exit
      _
    %569 = vsyncpa [#allocation3], 1
    %s570 = scalar_lea.sflag [#allocation3], 1
    %571 = vsyncpa %s570, 1
    %572 = vsyncpa [#allocation6], 1
    %s573 = scalar_lea.sflag [#allocation6], 1
    %574 = vsyncpa %s573, 1
    %575 = vsyncpa [#allocation9], 1
    %s576 = scalar_lea.sflag [#allocation9], 1
    %577 = vsyncpa %s576, 1
    %578 = vsyncpa [#allocation4], 1
    %s579 = scalar_lea.sflag [#allocation4], 1
    %580 = vsyncpa %s579, 1
    %581 = vsyncpa [#allocation13], 1
    %s582 = scalar_lea.sflag [#allocation13], 1
    %583 = vsyncpa %s582, 1

</llo_original>
